<compile_context>
chip_gen: v6e
topology: v6e:2x2x1
jax: 0.10.0
libtpu: 0.0.40
codegen_flags: <defaults>
</compile_context>

<pallas_src>
import functools

import jax
import jax.numpy as jnp
from jax.experimental import pallas as pl
from jax.experimental.pallas import tpu as pltpu


def _clamp_kernel(x_ref, o_ref, *, min_val, max_val):
    x = x_ref[...]
    if min_val is not None:
        x = jnp.maximum(x, jnp.asarray(min_val, x.dtype))
    if max_val is not None:
        x = jnp.minimum(x, jnp.asarray(max_val, x.dtype))
    o_ref[...] = x


def _clamp_ref(x, min_val, max_val):
    """Fused-XLA fallback with identical semantics to the kernel path."""
    if min_val is not None:
        x = jnp.maximum(x, jnp.asarray(min_val, x.dtype))
    if max_val is not None:
        x = jnp.minimum(x, jnp.asarray(max_val, x.dtype))
    return x


def clamp_pallas(
    x,
    min_val,
    max_val,
    *,
    target_tile_bytes=6 * 1024 * 1024,   # 4 live buffers ~24 MiB < 32 MiB scoped VMEM
    vmem_limit_bytes=32 * 1024 * 1024,   # explicit so v5e (16 MiB default) also takes big tiles
    small_threshold=1 << 20,             # below ~1M elems, fused XLA clip wins (no dispatch/fusion loss)
    inplace=False,                        # alias input->output; requires the caller to donate x at the jit boundary
):
    """Elementwise clamp via a lane-dense, tiled Pallas TPU kernel."""
    orig_shape = x.shape
    dtype = x.dtype
    n = x.size

    # Normalize bounds to Python scalars (or None for one-sided clamp).
    min_val = None if min_val is None else float(min_val)
    max_val = None if max_val is None else float(max_val)

    if min_val is None and max_val is None:
        return x

    # Tiny / mid-size inputs: a standalone Pallas launch forfeits XLA fusion
    # and cannot beat a fused elementwise clip.
    if n == 0 or n <= small_threshold:
        return _clamp_ref(x, min_val, max_val)

    # Lane-dense column width: largest power-of-2 divisor of n that is <= 512.
    cols = None
    for c in (512, 256, 128):
        if n % c == 0:
            cols = c
            break
    if cols is None:
        # Ragged element count (not a multiple of 128 — rare for NN tensors):
        # stay at 1x HBM traffic via the fused XLA path instead of pad+slice.
        return _clamp_ref(x, min_val, max_val)

    rows = n // cols
    x2 = x.reshape(rows, cols)

    itemsize = jnp.dtype(dtype).itemsize
    if rows < 16:
        # Too small to split into two sublane-aligned blocks: single full block.
        block_rows = rows
    else:
        # Rows per block from the VMEM budget (multiple of 8 for the sublane rule).
        rows_budget = max(8, (target_tile_bytes // (cols * itemsize)) // 8 * 8)
        num_blocks = pl.cdiv(rows, rows_budget)
        if num_blocks < 2:
            num_blocks = 2            # >=2 steps so v7x's second TensorCore works
        elif num_blocks % 2 == 1:
            num_blocks += 1           # even step count -> balanced megacore split
        block_rows = ((pl.cdiv(rows, num_blocks) + 7) // 8) * 8

    grid = (pl.cdiv(rows, block_rows),)

    kernel = functools.partial(_clamp_kernel, min_val=min_val, max_val=max_val)

    out2 = pl.pallas_call(
        kernel,
        out_shape=jax.ShapeDtypeStruct((rows, cols), dtype),
        grid=grid,
        in_specs=[pl.BlockSpec((block_rows, cols), lambda i: (i, 0))],
        out_specs=pl.BlockSpec((block_rows, cols), lambda i: (i, 0)),
        compiler_params=pltpu.CompilerParams(
            dimension_semantics=("parallel",),
            vmem_limit_bytes=vmem_limit_bytes,
        ),
        input_output_aliases=({0: 0} if inplace else {}),
    )(x2)

    return out2.reshape(orig_shape)


if __name__ == "__main__":
    # Module "parameters": clamp bounds (from Clamp.__init__ args).
    clamp_min = -0.5
    clamp_max = 0.5

    key = jax.random.PRNGKey(0)
    k_small, k_big, k_one = jax.random.split(key, 3)

    # Spec-sized input (2, 4, 16, 16): tiny, takes the fused-XLA fast path.
    x_small = jax.random.normal(k_small, (2, 4, 16, 16), dtype=jnp.float32)
    y_small = jax.block_until_ready(clamp_pallas(x_small, clamp_min, clamp_max))
    assert y_small.shape == x_small.shape and y_small.dtype == x_small.dtype
    assert jnp.allclose(y_small, jnp.clip(x_small, clamp_min, clamp_max))

    # Activation-sized input, forced onto the Pallas kernel path
    # (small_threshold=0) so the kernel itself is exercised and verified.
    x_big = jax.random.normal(k_big, (8, 4, 64, 64), dtype=jnp.float32)
    y_big = jax.block_until_ready(
        clamp_pallas(x_big, clamp_min, clamp_max, small_threshold=0)
    )
    assert y_big.shape == x_big.shape and y_big.dtype == x_big.dtype
    assert jnp.allclose(y_big, jnp.clip(x_big, clamp_min, clamp_max))

    # One-sided clamp (max=None), also on the kernel path.
    x_one = jax.random.normal(k_one, (4, 4, 32, 32), dtype=jnp.float32)
    y_one = jax.block_until_ready(
        clamp_pallas(x_one, clamp_min, None, small_threshold=0)
    )
    assert jnp.allclose(y_one, jnp.maximum(x_one, clamp_min))

    print("KERNEL_OK")
</pallas_src>

<mosaic_0001>
module attributes {stable_mosaic.version = 11 : i64} {
  func.func @_clamp_kernel(%arg0: i32, %arg1: memref<128x512xf32, #tpu.memory_space<vmem>>, %arg2: memref<128x512xf32, #tpu.memory_space<vmem>>) attributes {dimension_semantics = [#tpu.dimension_semantics<parallel>], iteration_bounds = array<i64: 2>, scalar_prefetch = 0 : i64, scratch_operands = 0 : i64, tpu.core_type = #tpu.core_type<tc>, window_params = [{transform_indices = @transform_0, window_bounds = array<i64: 128, 512>}, {transform_indices = @transform_1, window_bounds = array<i64: 128, 512>}]} {
    %c0 = arith.constant 0 : index
    %c0_0 = arith.constant 0 : index
    %0 = vector.load %arg1[%c0, %c0_0] : memref<128x512xf32, #tpu.memory_space<vmem>>, vector<128x512xf32>
    %cst = arith.constant -5.000000e-01 : f32
    %1 = vector.broadcast %cst : f32 to vector<128x512xf32>
    %2 = arith.maximumf %0, %1 : vector<128x512xf32>
    %cst_1 = arith.constant 5.000000e-01 : f32
    %3 = vector.broadcast %cst_1 : f32 to vector<128x512xf32>
    %4 = arith.minimumf %2, %3 : vector<128x512xf32>
    %c0_2 = arith.constant 0 : index
    %c0_3 = arith.constant 0 : index
    %5 = vector.load %arg2[%c0_2, %c0_3] : memref<128x512xf32, #tpu.memory_space<vmem>>, vector<128x512xf32>
    tpu.vector_store %arg2[%c0_2, %c0_3], %4 {strides = array<i32>} : memref<128x512xf32, #tpu.memory_space<vmem>>, vector<128x512xf32>,
    return
  }
  func.func @transform_0(%arg0: i32) -> (i32, i32) {
    %c0_i32 = arith.constant 0 : i32
    %c0_i32_0 = arith.constant 0 : i32
    return %arg0, %c0_i32 : i32, i32
  }
  func.func @transform_1(%arg0: i32) -> (i32, i32) {
    %c0_i32 = arith.constant 0 : i32
    %c0_i32_0 = arith.constant 0 : i32
    return %arg0, %c0_i32 : i32, i32
  }
}

</mosaic_0001>

<llo_original>
// kernel: tpu_custom_call.1
$region0: #{tpu_custom_call.1}
  #allocation0 [shape = 'u32[]', space=smem, size = 0x4, offset = 0x4, fixed_abs, tag = 'smem constant byte address 0x4 - core index']
  #allocation1 [shape = 'u32[144,128]{1,0:T(1,128)}', space=vmem, size = 0x12000, scoped, tag = 'internal scratch']
  %s0 = inlined_call_operand.hbm [shape: f32[256,512], index: 0, kind: input, shape index: {}]
  %s1 = inlined_call_operand.hbm [shape: f32[256,512], index: 1, kind: output, shape index: {}]
  %s2 = sld [smem:[#allocation0]]
  $region41: #{tpu_custom_call.1} parent=0
    _
  %s4 = ssub.s32 1, %s2
  %s5 = scalar_select 0, %s4, %s2
  $region1: #{tpu_custom_call.1} parent=0
    #allocation2 [shape = 'u8[524288]{0}', space=vmem, size = 0x80000, scoped, tag = 'input window, operand 0']
    #allocation3 [shape = 's32[2]{0}', space=sflag, size = 0x8, scoped, tag = 'scoped memory for tpu_custom_call.1']
    #allocation4 [shape = 's32[2]{0}', space=sflag, size = 0x8, scoped, tag = 'scoped memory for tpu_custom_call.1']
    #allocation5 [shape = 'u8[524288]{0}', space=vmem, size = 0x80000, scoped, tag = 'output window, operand 0']
    %6 = vsyncpa [#allocation3], 0
    %s7 = scalar_lea.sflag [#allocation3], 1
    %8 = vsyncpa %s7, 0
    %9 = vsyncpa [#allocation4], 0
    %s10 = scalar_lea.sflag [#allocation4], 1
    %11 = vsyncpa %s10, 0
    loop: start=0, step=1, limit=4
    $region2: #{tpu_custom_call.1} parent=1 // loop_pre_header
      _
    $region3: #{tpu_custom_call.1} parent=1 // loop_header
      %s13 = sphi 0, %s17
      %p14 = scmp.ge.s32.totalorder %s13, 4
      %s23 = sphi 0, %s25
      %s26 = sphi 0, %s23
      %s27 = sphi 0, %s26
      %s43 = sphi 0, %s27
      %s49 = sphi 0, %s51
      %s52 = sphi 0, %s49
      %s53 = sphi 0, %s52
      %s69 = sphi 0, %s53
    $region4: #{tpu_custom_call.1} parent=1 // loop_header_branch
      %16 = sbr.rel (%p14) target = $region8
    $region5: #{tpu_custom_call.1} parent=1 // loop_body
      %s18 = ssub.s32 %s13, 1
      %s19 = ssub.s32 %s13, 2
      %s20 = sadd.s32 %s13, 1
      %s21 = ssub.s32 %s13, %s20
      %p22 = scmp.eq.s32.totalorder %s21, 0
      %s24 = sadd.s32 %s23, 1
      %s25 = scalar_select %p22, %s23, %s24
      %p28 = pneg %p22
      %p29 = scmp.eq.s32.totalorder %s13, 1
      %p30 = por %p28, %p29
      %p31 = scmp.ne.s32.totalorder %s23, %s26
      %p32 = scmp.eq.s32.totalorder %s13, 0
      %p33 = por %p31, %p32
      %p34 = scmp.ne.s32.totalorder %s23, %s26
      %p35 = scmp.eq.s32.totalorder %s18, 1
      %p36 = por %p34, %p35
      %p37 = scmp.ne.s32.totalorder %s26, %s27
      %p38 = scmp.eq.s32.totalorder %s18, 0
      %p39 = por %p37, %p38
      %p40 = scmp.ne.s32.totalorder %s26, %s27
      %p41 = scmp.eq.s32.totalorder %s19, 1
      %p42 = por %p40, %p41
      %p44 = scmp.ne.s32.totalorder %s27, %s43
      %p45 = scmp.eq.s32.totalorder %s19, 0
      %p46 = por %p44, %p45
      %s47 = ssub.s32 %s13, %s20
      %p48 = scmp.eq.s32.totalorder %s47, 0
      %s50 = sadd.s32 %s49, 1
      %s51 = scalar_select %p48, %s49, %s50
      %p54 = pneg %p48
      %p55 = scmp.eq.s32.totalorder %s13, 1
      %p56 = por %p54, %p55
      %p57 = scmp.ne.s32.totalorder %s49, %s52
      %p58 = scmp.eq.s32.totalorder %s13, 0
      %p59 = por %p57, %p58
      %p60 = scmp.ne.s32.totalorder %s49, %s52
      %p61 = scmp.eq.s32.totalorder %s18, 1
      %p62 = por %p60, %p61
      %p63 = scmp.ne.s32.totalorder %s52, %s53
      %p64 = scmp.eq.s32.totalorder %s18, 0
      %p65 = por %p63, %p64
      %p66 = scmp.ne.s32.totalorder %s52, %s53
      %p67 = scmp.eq.s32.totalorder %s19, 1
      %p68 = por %p66, %p67
      %p70 = scmp.ne.s32.totalorder %s53, %s69
      %p71 = scmp.eq.s32.totalorder %s19, 0
      %p72 = por %p70, %p71
      %p73 = scmp.le.s32.totalorder 1, %s13
      %p74 = scmp.lt.s32.totalorder %s13, 3
      %p75 = pnand %p73, %p74
      %p76 = pneg %p75
      // Predicated region
      $region9: #{tpu_custom_call.1} parent=5 // pred_check
        _
      $region10: #{tpu_custom_call.1} parent=5 // pred_check_branch
        %78 = sbr.rel (%p75) target = $region12
      $region11: #{tpu_custom_call.1} parent=5 // pred_region
        %s79 = ssub.s32 %s13, 1
      $region12: #{tpu_custom_call.1} parent=5 // pred_fallthru
        _
      %p80 = scmp.lt.s32.totalorder %s13, 2
      // Predicated region
      $region13: #{tpu_custom_call.1} parent=5 // pred_check
        %p81 = pneg %p80
      $region14: #{tpu_custom_call.1} parent=5 // pred_check_branch
        %83 = sbr.rel (%p81) target = $region16
      $region15: #{tpu_custom_call.1} parent=5 // pred_region
        // Predicated region
        $region17: #{tpu_custom_call.1} parent=15 // pred_check
          %p84 = pneg %p33
        $region18: #{tpu_custom_call.1} parent=15 // pred_check_branch
          %86 = sbr.rel (%p84) target = $region20
        $region19: #{tpu_custom_call.1} parent=15 // pred_region
          %s87 = sand.u32 %s23, 1
          %s88 = scalar_lea.sflag [#allocation3], %s87
          %s89 = sand.u32 %s23, 1
          %s90 = smul.addr %s89, 512
          %s91 = scalar_lea.vmem [#allocation2], %s90
          %s92 = smul.u32 16, %s13
          %s94 = ssub.s32 8192, 8192
          %95 = vsyncadd %s88, %s94
          %s96 = smul.addr %s92, 4
          %s97 = smul.addr %s96, 128
          %s98 = scalar_lea.hbm %s0, %s97
          %s99 = sshll.u32 %s91, 4
          %s100 = int_to_ptr.vmem [resolvable:$true] %s99
          %105 = dma.hbm_to_vmem [thread:$0]  %s98, 8192, %s100, %s88, 512, 512, 32
        $region20: #{tpu_custom_call.1} parent=15 // pred_fallthru
          _
      $region16: #{tpu_custom_call.1} parent=5 // pred_fallthru
        _
      %p106 = scmp.le.s32.totalorder 1, %s13
      %p107 = scmp.lt.s32.totalorder %s13, 3
      %p108 = pnand %p106, %p107
      %p109 = pneg %p108
      // Predicated region
      $region21: #{tpu_custom_call.1} parent=5 // pred_check
        _
      $region22: #{tpu_custom_call.1} parent=5 // pred_check_branch
        %111 = sbr.rel (%p108) target = $region24
      $region23: #{tpu_custom_call.1} parent=5 // pred_region
        %s112 = ssub.s32 %s13, 1
        %s113 = sand.u32 %s26, 1
        %s114 = scalar_lea.sflag [#allocation3], %s113
        %s115 = sand.u32 %s26, 1
        %s116 = smul.addr %s115, 512
        %s117 = scalar_lea.vmem [#allocation2], %s116
        // Predicated region
        $region25: #{tpu_custom_call.1} parent=23 // pred_check
          %p118 = pneg %p39
        $region26: #{tpu_custom_call.1} parent=23 // pred_check_branch
          %120 = sbr.rel (%p118) target = $region28
        $region27: #{tpu_custom_call.1} parent=23 // pred_region
          %121 = dma.done %s114, 8192
        $region28: #{tpu_custom_call.1} parent=23 // pred_fallthru
          _
        %s122 = sand.u32 %s26, 1
        %s123 = scalar_lea.sflag [#allocation3], %s122
        %s124 = sand.u32 %s26, 1
        %s125 = smul.addr %s124, 512
        %s126 = scalar_lea.vmem [#allocation2], %s125
        %p127 = pneg %p39
        %p128 = pneg %p36
        %p129 = pneg %p65
        %p130 = pneg %p62
        %s131 = sand.u32 %s52, 1
        %s132 = scalar_lea.sflag [#allocation4], %s131
        %s133 = sand.u32 %s52, 1
        %s134 = smul.addr %s133, 512
        %s135 = scalar_lea.vmem [#allocation5], %s134
        %s136 = smul.u32 16, %s18
        %s137 = smul.u32 16, %s18
        %v138 = vld [vmem:[%s117] sm:$0xff]
        %v139 = vld [vmem:[%s117 + $0x8] sm:$0xff]
        %v140 = vld [vmem:[%s117 + $0x10] sm:$0xff]
        %v141 = vld [vmem:[%s117 + $0x18] sm:$0xff]
        %v142 = vld [vmem:[%s117 + $0x20] sm:$0xff]
        %v143 = vld [vmem:[%s117 + $0x28] sm:$0xff]
        %v144 = vld [vmem:[%s117 + $0x30] sm:$0xff]
        %v145 = vld [vmem:[%s117 + $0x38] sm:$0xff]
        %v146 = vld [vmem:[%s117 + $0x40] sm:$0xff]
        %v147 = vld [vmem:[%s117 + $0x48] sm:$0xff]
        %v148 = vld [vmem:[%s117 + $0x50] sm:$0xff]
        %v149 = vld [vmem:[%s117 + $0x58] sm:$0xff]
        %v150 = vld [vmem:[%s117 + $0x60] sm:$0xff]
        %v151 = vld [vmem:[%s117 + $0x68] sm:$0xff]
        %v152 = vld [vmem:[%s117 + $0x70] sm:$0xff]
        %v153 = vld [vmem:[%s117 + $0x78] sm:$0xff]
        %v154 = vld [vmem:[%s117 + $0x80] sm:$0xff]
        %v155 = vld [vmem:[%s117 + $0x88] sm:$0xff]
        %v156 = vld [vmem:[%s117 + $0x90] sm:$0xff]
        %v157 = vld [vmem:[%s117 + $0x98] sm:$0xff]
        %v158 = vld [vmem:[%s117 + $0xa0] sm:$0xff]
        %v159 = vld [vmem:[%s117 + $0xa8] sm:$0xff]
        %v160 = vld [vmem:[%s117 + $0xb0] sm:$0xff]
        %v161 = vld [vmem:[%s117 + $0xb8] sm:$0xff]
        %v162 = vld [vmem:[%s117 + $0xc0] sm:$0xff]
        %v163 = vld [vmem:[%s117 + $0xc8] sm:$0xff]
        %v164 = vld [vmem:[%s117 + $0xd0] sm:$0xff]
        %v165 = vld [vmem:[%s117 + $0xd8] sm:$0xff]
        %v166 = vld [vmem:[%s117 + $0xe0] sm:$0xff]
        %v167 = vld [vmem:[%s117 + $0xe8] sm:$0xff]
        %v168 = vld [vmem:[%s117 + $0xf0] sm:$0xff]
        %v169 = vld [vmem:[%s117 + $0xf8] sm:$0xff]
        %v170 = vld [vmem:[%s117 + $0x100] sm:$0xff]
        %v171 = vld [vmem:[%s117 + $0x108] sm:$0xff]
        %v172 = vld [vmem:[%s117 + $0x110] sm:$0xff]
        %v173 = vld [vmem:[%s117 + $0x118] sm:$0xff]
        %v174 = vld [vmem:[%s117 + $0x120] sm:$0xff]
        %v175 = vld [vmem:[%s117 + $0x128] sm:$0xff]
        %v176 = vld [vmem:[%s117 + $0x130] sm:$0xff]
        %v177 = vld [vmem:[%s117 + $0x138] sm:$0xff]
        %v178 = vld [vmem:[%s117 + $0x140] sm:$0xff]
        %v179 = vld [vmem:[%s117 + $0x148] sm:$0xff]
        %v180 = vld [vmem:[%s117 + $0x150] sm:$0xff]
        %v181 = vld [vmem:[%s117 + $0x158] sm:$0xff]
        %v182 = vld [vmem:[%s117 + $0x160] sm:$0xff]
        %v183 = vld [vmem:[%s117 + $0x168] sm:$0xff]
        %v184 = vld [vmem:[%s117 + $0x170] sm:$0xff]
        %v185 = vld [vmem:[%s117 + $0x178] sm:$0xff]
        %v186 = vld [vmem:[%s117 + $0x180] sm:$0xff]
        %v187 = vld [vmem:[%s117 + $0x188] sm:$0xff]
        %v188 = vld [vmem:[%s117 + $0x190] sm:$0xff]
        %v189 = vld [vmem:[%s117 + $0x198] sm:$0xff]
        %v190 = vld [vmem:[%s117 + $0x1a0] sm:$0xff]
        %v191 = vld [vmem:[%s117 + $0x1a8] sm:$0xff]
        %v192 = vld [vmem:[%s117 + $0x1b0] sm:$0xff]
        %v193 = vld [vmem:[%s117 + $0x1b8] sm:$0xff]
        %v194 = vld [vmem:[%s117 + $0x1c0] sm:$0xff]
        %v195 = vld [vmem:[%s117 + $0x1c8] sm:$0xff]
        %v196 = vld [vmem:[%s117 + $0x1d0] sm:$0xff]
        %v197 = vld [vmem:[%s117 + $0x1d8] sm:$0xff]
        %v198 = vld [vmem:[%s117 + $0x1e0] sm:$0xff]
        %v199 = vld [vmem:[%s117 + $0x1e8] sm:$0xff]
        %v200 = vld [vmem:[%s117 + $0x1f0] sm:$0xff]
        %v201 = vld [vmem:[%s117 + $0x1f8] sm:$0xff]
        %v202 = vmax.f32 %v138, -0.5
        %v203 = vmax.f32 %v139, -0.5
        %v204 = vmax.f32 %v140, -0.5
        %v205 = vmax.f32 %v141, -0.5
        %v206 = vmax.f32 %v142, -0.5
        %v207 = vmax.f32 %v143, -0.5
        %v208 = vmax.f32 %v144, -0.5
        %v209 = vmax.f32 %v145, -0.5
        %v210 = vmax.f32 %v146, -0.5
        %v211 = vmax.f32 %v147, -0.5
        %v212 = vmax.f32 %v148, -0.5
        %v213 = vmax.f32 %v149, -0.5
        %v214 = vmax.f32 %v150, -0.5
        %v215 = vmax.f32 %v151, -0.5
        %v216 = vmax.f32 %v152, -0.5
        %v217 = vmax.f32 %v153, -0.5
        %v218 = vmax.f32 %v154, -0.5
        %v219 = vmax.f32 %v155, -0.5
        %v220 = vmax.f32 %v156, -0.5
        %v221 = vmax.f32 %v157, -0.5
        %v222 = vmax.f32 %v158, -0.5
        %v223 = vmax.f32 %v159, -0.5
        %v224 = vmax.f32 %v160, -0.5
        %v225 = vmax.f32 %v161, -0.5
        %v226 = vmax.f32 %v162, -0.5
        %v227 = vmax.f32 %v163, -0.5
        %v228 = vmax.f32 %v164, -0.5
        %v229 = vmax.f32 %v165, -0.5
        %v230 = vmax.f32 %v166, -0.5
        %v231 = vmax.f32 %v167, -0.5
        %v232 = vmax.f32 %v168, -0.5
        %v233 = vmax.f32 %v169, -0.5
        %v234 = vmax.f32 %v170, -0.5
        %v235 = vmax.f32 %v171, -0.5
        %v236 = vmax.f32 %v172, -0.5
        %v237 = vmax.f32 %v173, -0.5
        %v238 = vmax.f32 %v174, -0.5
        %v239 = vmax.f32 %v175, -0.5
        %v240 = vmax.f32 %v176, -0.5
        %v241 = vmax.f32 %v177, -0.5
        %v242 = vmax.f32 %v178, -0.5
        %v243 = vmax.f32 %v179, -0.5
        %v244 = vmax.f32 %v180, -0.5
        %v245 = vmax.f32 %v181, -0.5
        %v246 = vmax.f32 %v182, -0.5
        %v247 = vmax.f32 %v183, -0.5
        %v248 = vmax.f32 %v184, -0.5
        %v249 = vmax.f32 %v185, -0.5
        %v250 = vmax.f32 %v186, -0.5
        %v251 = vmax.f32 %v187, -0.5
        %v252 = vmax.f32 %v188, -0.5
        %v253 = vmax.f32 %v189, -0.5
        %v254 = vmax.f32 %v190, -0.5
        %v255 = vmax.f32 %v191, -0.5
        %v256 = vmax.f32 %v192, -0.5
        %v257 = vmax.f32 %v193, -0.5
        %v258 = vmax.f32 %v194, -0.5
        %v259 = vmax.f32 %v195, -0.5
        %v260 = vmax.f32 %v196, -0.5
        %v261 = vmax.f32 %v197, -0.5
        %v262 = vmax.f32 %v198, -0.5
        %v263 = vmax.f32 %v199, -0.5
        %v264 = vmax.f32 %v200, -0.5
        %v265 = vmax.f32 %v201, -0.5
        %v266 = vmin.f32 %v202, 0.5
        %v267 = vmin.f32 %v203, 0.5
        %v268 = vmin.f32 %v204, 0.5
        %v269 = vmin.f32 %v205, 0.5
        %v270 = vmin.f32 %v206, 0.5
        %v271 = vmin.f32 %v207, 0.5
        %v272 = vmin.f32 %v208, 0.5
        %v273 = vmin.f32 %v209, 0.5
        %v274 = vmin.f32 %v210, 0.5
        %v275 = vmin.f32 %v211, 0.5
        %v276 = vmin.f32 %v212, 0.5
        %v277 = vmin.f32 %v213, 0.5
        %v278 = vmin.f32 %v214, 0.5
        %v279 = vmin.f32 %v215, 0.5
        %v280 = vmin.f32 %v216, 0.5
        %v281 = vmin.f32 %v217, 0.5
        %v282 = vmin.f32 %v218, 0.5
        %v283 = vmin.f32 %v219, 0.5
        %v284 = vmin.f32 %v220, 0.5
        %v285 = vmin.f32 %v221, 0.5
        %v286 = vmin.f32 %v222, 0.5
        %v287 = vmin.f32 %v223, 0.5
        %v288 = vmin.f32 %v224, 0.5
        %v289 = vmin.f32 %v225, 0.5
        %v290 = vmin.f32 %v226, 0.5
        %v291 = vmin.f32 %v227, 0.5
        %v292 = vmin.f32 %v228, 0.5
        %v293 = vmin.f32 %v229, 0.5
        %v294 = vmin.f32 %v230, 0.5
        %v295 = vmin.f32 %v231, 0.5
        %v296 = vmin.f32 %v232, 0.5
        %v297 = vmin.f32 %v233, 0.5
        %v298 = vmin.f32 %v234, 0.5
        %v299 = vmin.f32 %v235, 0.5
        %v300 = vmin.f32 %v236, 0.5
        %v301 = vmin.f32 %v237, 0.5
        %v302 = vmin.f32 %v238, 0.5
        %v303 = vmin.f32 %v239, 0.5
        %v304 = vmin.f32 %v240, 0.5
        %v305 = vmin.f32 %v241, 0.5
        %v306 = vmin.f32 %v242, 0.5
        %v307 = vmin.f32 %v243, 0.5
        %v308 = vmin.f32 %v244, 0.5
        %v309 = vmin.f32 %v245, 0.5
        %v310 = vmin.f32 %v246, 0.5
        %v311 = vmin.f32 %v247, 0.5
        %v312 = vmin.f32 %v248, 0.5
        %v313 = vmin.f32 %v249, 0.5
        %v314 = vmin.f32 %v250, 0.5
        %v315 = vmin.f32 %v251, 0.5
        %v316 = vmin.f32 %v252, 0.5
        %v317 = vmin.f32 %v253, 0.5
        %v318 = vmin.f32 %v254, 0.5
        %v319 = vmin.f32 %v255, 0.5
        %v320 = vmin.f32 %v256, 0.5
        %v321 = vmin.f32 %v257, 0.5
        %v322 = vmin.f32 %v258, 0.5
        %v323 = vmin.f32 %v259, 0.5
        %v324 = vmin.f32 %v260, 0.5
        %v325 = vmin.f32 %v261, 0.5
        %v326 = vmin.f32 %v262, 0.5
        %v327 = vmin.f32 %v263, 0.5
        %v328 = vmin.f32 %v264, 0.5
        %v329 = vmin.f32 %v265, 0.5
        %330 = vst [vmem:[%s135] sm:$0xff] %v266
        %331 = vst [vmem:[%s135 + $0x8] sm:$0xff] %v267
        %332 = vst [vmem:[%s135 + $0x10] sm:$0xff] %v268
        %333 = vst [vmem:[%s135 + $0x18] sm:$0xff] %v269
        %334 = vst [vmem:[%s135 + $0x20] sm:$0xff] %v270
        %335 = vst [vmem:[%s135 + $0x28] sm:$0xff] %v271
        %336 = vst [vmem:[%s135 + $0x30] sm:$0xff] %v272
        %337 = vst [vmem:[%s135 + $0x38] sm:$0xff] %v273
        %338 = vst [vmem:[%s135 + $0x40] sm:$0xff] %v274
        %339 = vst [vmem:[%s135 + $0x48] sm:$0xff] %v275
        %340 = vst [vmem:[%s135 + $0x50] sm:$0xff] %v276
        %341 = vst [vmem:[%s135 + $0x58] sm:$0xff] %v277
        %342 = vst [vmem:[%s135 + $0x60] sm:$0xff] %v278
        %343 = vst [vmem:[%s135 + $0x68] sm:$0xff] %v279
        %344 = vst [vmem:[%s135 + $0x70] sm:$0xff] %v280
        %345 = vst [vmem:[%s135 + $0x78] sm:$0xff] %v281
        %346 = vst [vmem:[%s135 + $0x80] sm:$0xff] %v282
        %347 = vst [vmem:[%s135 + $0x88] sm:$0xff] %v283
        %348 = vst [vmem:[%s135 + $0x90] sm:$0xff] %v284
        %349 = vst [vmem:[%s135 + $0x98] sm:$0xff] %v285
        %350 = vst [vmem:[%s135 + $0xa0] sm:$0xff] %v286
        %351 = vst [vmem:[%s135 + $0xa8] sm:$0xff] %v287
        %352 = vst [vmem:[%s135 + $0xb0] sm:$0xff] %v288
        %353 = vst [vmem:[%s135 + $0xb8] sm:$0xff] %v289
        %354 = vst [vmem:[%s135 + $0xc0] sm:$0xff] %v290
        %355 = vst [vmem:[%s135 + $0xc8] sm:$0xff] %v291
        %356 = vst [vmem:[%s135 + $0xd0] sm:$0xff] %v292
        %357 = vst [vmem:[%s135 + $0xd8] sm:$0xff] %v293
        %358 = vst [vmem:[%s135 + $0xe0] sm:$0xff] %v294
        %359 = vst [vmem:[%s135 + $0xe8] sm:$0xff] %v295
        %360 = vst [vmem:[%s135 + $0xf0] sm:$0xff] %v296
        %361 = vst [vmem:[%s135 + $0xf8] sm:$0xff] %v297
        %362 = vst [vmem:[%s135 + $0x100] sm:$0xff] %v298
        %363 = vst [vmem:[%s135 + $0x108] sm:$0xff] %v299
        %364 = vst [vmem:[%s135 + $0x110] sm:$0xff] %v300
        %365 = vst [vmem:[%s135 + $0x118] sm:$0xff] %v301
        %366 = vst [vmem:[%s135 + $0x120] sm:$0xff] %v302
        %367 = vst [vmem:[%s135 + $0x128] sm:$0xff] %v303
        %368 = vst [vmem:[%s135 + $0x130] sm:$0xff] %v304
        %369 = vst [vmem:[%s135 + $0x138] sm:$0xff] %v305
        %370 = vst [vmem:[%s135 + $0x140] sm:$0xff] %v306
        %371 = vst [vmem:[%s135 + $0x148] sm:$0xff] %v307
        %372 = vst [vmem:[%s135 + $0x150] sm:$0xff] %v308
        %373 = vst [vmem:[%s135 + $0x158] sm:$0xff] %v309
        %374 = vst [vmem:[%s135 + $0x160] sm:$0xff] %v310
        %375 = vst [vmem:[%s135 + $0x168] sm:$0xff] %v311
        %376 = vst [vmem:[%s135 + $0x170] sm:$0xff] %v312
        %377 = vst [vmem:[%s135 + $0x178] sm:$0xff] %v313
        %378 = vst [vmem:[%s135 + $0x180] sm:$0xff] %v314
        %379 = vst [vmem:[%s135 + $0x188] sm:$0xff] %v315
        %380 = vst [vmem:[%s135 + $0x190] sm:$0xff] %v316
        %381 = vst [vmem:[%s135 + $0x198] sm:$0xff] %v317
        %382 = vst [vmem:[%s135 + $0x1a0] sm:$0xff] %v318
        %383 = vst [vmem:[%s135 + $0x1a8] sm:$0xff] %v319
        %384 = vst [vmem:[%s135 + $0x1b0] sm:$0xff] %v320
        %385 = vst [vmem:[%s135 + $0x1b8] sm:$0xff] %v321
        %386 = vst [vmem:[%s135 + $0x1c0] sm:$0xff] %v322
        %387 = vst [vmem:[%s135 + $0x1c8] sm:$0xff] %v323
        %388 = vst [vmem:[%s135 + $0x1d0] sm:$0xff] %v324
        %389 = vst [vmem:[%s135 + $0x1d8] sm:$0xff] %v325
        %390 = vst [vmem:[%s135 + $0x1e0] sm:$0xff] %v326
        %391 = vst [vmem:[%s135 + $0x1e8] sm:$0xff] %v327
        %392 = vst [vmem:[%s135 + $0x1f0] sm:$0xff] %v328
        %393 = vst [vmem:[%s135 + $0x1f8] sm:$0xff] %v329
        %s394 = sand.u32 %s52, 1
        %s395 = scalar_lea.sflag [#allocation4], %s394
        %s396 = sand.u32 %s52, 1
        %s397 = smul.addr %s396, 512
        %s398 = scalar_lea.vmem [#allocation5], %s397
        // Predicated region
        $region29: #{tpu_custom_call.1} parent=23 // pred_check
          %p399 = pneg %p62
        $region30: #{tpu_custom_call.1} parent=23 // pred_check_branch
          %401 = sbr.rel (%p399) target = $region32
        $region31: #{tpu_custom_call.1} parent=23 // pred_region
          %s402 = smul.u32 16, %s18
          %s404 = ssub.s32 8192, 8192
          %405 = vsyncadd %s395, %s404
          %s406 = smul.addr %s402, 4
          %s407 = smul.addr %s406, 128
          %s408 = scalar_lea.hbm %s1, %s407
          %s409 = sshll.u32 %s398, 4
          %s410 = int_to_ptr.vmem [resolvable:$true] %s409
          %415 = dma.vmem_to_hbm [thread:$0]  %s410, 8192, %s408, %s395, 512, 512, 32
        $region32: #{tpu_custom_call.1} parent=23 // pred_fallthru
          _
      $region24: #{tpu_custom_call.1} parent=5 // pred_fallthru
        _
      %p416 = scmp.le.s32.totalorder 2, %s13
      // Predicated region
      $region33: #{tpu_custom_call.1} parent=5 // pred_check
        %p417 = pneg %p416
      $region34: #{tpu_custom_call.1} parent=5 // pred_check_branch
        %419 = sbr.rel (%p417) target = $region36
      $region35: #{tpu_custom_call.1} parent=5 // pred_region
        %s420 = ssub.s32 %s13, 2
        // Predicated region
        $region37: #{tpu_custom_call.1} parent=35 // pred_check
          %p421 = pneg %p68
        $region38: #{tpu_custom_call.1} parent=35 // pred_check_branch
          %423 = sbr.rel (%p421) target = $region40
        $region39: #{tpu_custom_call.1} parent=35 // pred_region
          %s424 = sand.u32 %s53, 1
          %s425 = scalar_lea.sflag [#allocation4], %s424
          %s426 = sand.u32 %s53, 1
          %s427 = smul.addr %s426, 512
          %s428 = scalar_lea.vmem [#allocation5], %s427
          %429 = dma.done %s425, 8192
        $region40: #{tpu_custom_call.1} parent=35 // pred_fallthru
          _
      $region36: #{tpu_custom_call.1} parent=5 // pred_fallthru
        _
    $region6: #{tpu_custom_call.1} parent=1 // loop_footer
      %s17 = sadd.s32 1, %s13
    $region7: #{tpu_custom_call.1} parent=1 // loop_footer_branch
      %12 = sbr.rel target = $region3
    $region8: #{tpu_custom_call.1} parent=1 // loop_exit
      _
    %430 = vsyncpa [#allocation3], 1
    %s431 = scalar_lea.sflag [#allocation3], 1
    %432 = vsyncpa %s431, 1
    %433 = vsyncpa [#allocation4], 1
    %s434 = scalar_lea.sflag [#allocation4], 1
    %435 = vsyncpa %s434, 1

</llo_original>
